<compile_context>
chip_gen: v7x
topology: tpu7x:2x2x1
jax: 0.10.0
libtpu: 0.0.40
codegen_flags: <defaults>
</compile_context>

<pallas_src>
import functools

import jax
import jax.numpy as jnp
from jax.experimental import pallas as pl
from jax.experimental.pallas import tpu as pltpu


def _fused_linear_kernel(x_ref, w_ref, b_ref, o_ref, acc_ref, *, apply_gelu):
    """One (tm, tn) output tile of  y = act(x @ w + b)  accumulated over k."""
    k = pl.program_id(2)

    @pl.when(k == 0)
    def _():
        acc_ref[...] = jnp.zeros_like(acc_ref)

    acc_ref[...] += jnp.dot(
        x_ref[...], w_ref[...], preferred_element_type=jnp.float32
    )

    @pl.when(k == pl.num_programs(2) - 1)
    def _():
        acc = acc_ref[...] + b_ref[...].astype(jnp.float32)
        if apply_gelu:
            # tanh-approximate GELU (matches the PyTorch GELU module in the spec).
            c = jnp.sqrt(jnp.float32(2.0 / jnp.pi))
            acc = 0.5 * acc * (1.0 + jnp.tanh(c * (acc + 0.044715 * acc * acc * acc)))
        o_ref[...] = acc.astype(o_ref.dtype)


def _pick_tile(dim, cap, align):
    """Largest `align`-multiple divisor of `dim` that is <= cap, else full dim."""
    if dim <= cap:
        return dim
    t = (cap // align) * align
    while t >= align:
        if dim % t == 0:
            return t
        t -= align
    return dim  # fall back to full extent (always legal for a BlockSpec)


def fused_linear(x, w, b, *, apply_gelu=False, tm_cap=256, tn_cap=512, tk_cap=512):
    """y = gelu?(x @ w + b) with x:[M,K], w:[K,N], b:[N] -> [M,N]."""
    M, K = x.shape
    Kw, N = w.shape
    assert K == Kw, (K, Kw)
    b2 = b.reshape(1, N)

    tm = _pick_tile(M, tm_cap, 8)
    tn = _pick_tile(N, tn_cap, 128)
    tk = _pick_tile(K, tk_cap, 128)
    grid = (M // tm, N // tn, K // tk)

    kernel = functools.partial(_fused_linear_kernel, apply_gelu=apply_gelu)

    return pl.pallas_call(
        kernel,
        out_shape=jax.ShapeDtypeStruct((M, N), x.dtype),
        grid_spec=pltpu.PrefetchScalarGridSpec(
            num_scalar_prefetch=0,
            grid=grid,
            in_specs=[
                pl.BlockSpec((tm, tk), lambda i, j, k: (i, k)),
                pl.BlockSpec((tk, tn), lambda i, j, k: (k, j)),
                pl.BlockSpec((1, tn), lambda i, j, k: (0, j)),
            ],
            out_specs=pl.BlockSpec((tm, tn), lambda i, j, k: (i, j)),
            scratch_shapes=[pltpu.VMEM((tm, tn), jnp.float32)],
        ),
        compiler_params=pltpu.CompilerParams(
            dimension_semantics=("parallel", "parallel", "arbitrary"),
            # Below v7x's 64 MiB physical VMEM, above the v5e/v6e 16/32 MiB
            # scoped defaults, so the larger tiles double-buffer comfortably.
            vmem_limit_bytes=48 * 1024 * 1024,
        ),
    )(x, w, b2)


def feed_forward(x, params):
    """FeedForward: Linear(E, 4E) -> GELU(tanh) -> Linear(4E, E)."""
    orig_shape = x.shape
    emb_dim = orig_shape[-1]
    x2 = x.reshape(-1, emb_dim)  # [batch*seq, E]
    h = fused_linear(x2, params["w1"], params["b1"], apply_gelu=True)
    y = fused_linear(h, params["w2"], params["b2"], apply_gelu=False)
    return y.reshape(orig_shape)


def feed_forward_ref(x, params):
    """Pure-JAX reference (same math, f32 throughout)."""
    xf = x.astype(jnp.float32)
    h = xf @ params["w1"].astype(jnp.float32) + params["b1"].astype(jnp.float32)
    c = jnp.sqrt(jnp.float32(2.0 / jnp.pi))
    h = 0.5 * h * (1.0 + jnp.tanh(c * (h + 0.044715 * h**3)))
    y = h @ params["w2"].astype(jnp.float32) + params["b2"].astype(jnp.float32)
    return y.astype(x.dtype)


def init_params(key, emb_dim, dtype=jnp.float32):
    hidden = 4 * emb_dim
    k1, k2, k3, k4 = jax.random.split(key, 4)
    # Weights stored as [in, out] (i.e. already transposed vs. torch's [out, in]).
    s1 = 1.0 / jnp.sqrt(jnp.float32(emb_dim))
    s2 = 1.0 / jnp.sqrt(jnp.float32(hidden))
    return {
        "w1": (jax.random.uniform(k1, (emb_dim, hidden), jnp.float32, -1, 1) * s1).astype(dtype),
        "b1": (jax.random.uniform(k2, (hidden,), jnp.float32, -1, 1) * s1).astype(dtype),
        "w2": (jax.random.uniform(k3, (hidden, emb_dim), jnp.float32, -1, 1) * s2).astype(dtype),
        "b2": (jax.random.uniform(k4, (emb_dim,), jnp.float32, -1, 1) * s2).astype(dtype),
    }


if __name__ == "__main__":
    key = jax.random.PRNGKey(0)
    k_x, k_p = jax.random.split(key)

    # Small shapes consistent with the module: batch=2, seq=8, emb_dim=32.
    batch, seq, emb_dim = 2, 8, 32
    x = jax.random.normal(k_x, (batch, seq, emb_dim), dtype=jnp.float32)
    params = init_params(k_p, emb_dim, dtype=jnp.float32)

    y = feed_forward(x, params)
    jax.block_until_ready(y)

    y_ref = feed_forward_ref(x, params)
    assert y.shape == x.shape and y.dtype == x.dtype
    assert jnp.allclose(y, y_ref, atol=1e-4, rtol=1e-4), (
        float(jnp.max(jnp.abs(y - y_ref)))
    )
    print("KERNEL_OK")
</pallas_src>

<mosaic_0001>
module attributes {stable_mosaic.version = 11 : i64} {
  func.func @_fused_linear_kernel(%arg0: i32, %arg1: i32, %arg2: i32, %arg3: memref<16x32xf32, #tpu.memory_space<vmem>>, %arg4: memref<32x128xf32, #tpu.memory_space<vmem>>, %arg5: memref<1x128xf32, #tpu.memory_space<vmem>>, %arg6: memref<16x128xf32, #tpu.memory_space<vmem>>, %arg7: memref<16x128xf32, #tpu.memory_space<vmem>>) attributes {dimension_semantics = [#tpu.dimension_semantics<parallel>, #tpu.dimension_semantics<parallel>, #tpu.dimension_semantics<arbitrary>], iteration_bounds = array<i64: 1, 1, 1>, scalar_prefetch = 0 : i64, scratch_operands = 1 : i64, tpu.core_type = #tpu.core_type<tc>, window_params = [{transform_indices = @transform_0, window_bounds = array<i64: 16, 32>}, {transform_indices = @transform_1, window_bounds = array<i64: 32, 128>}, {transform_indices = @transform_2, window_bounds = array<i64: 1, 128>}, {transform_indices = @transform_3, window_bounds = array<i64: 16, 128>}]} {
    %c0_i32 = arith.constant 0 : i32
    %0 = arith.cmpi eq, %arg2, %c0_i32 : i32
    %1 = arith.extui %0 : i1 to i32
    %c0_i32_0 = arith.constant 0 : i32
    %2 = arith.cmpi ne, %1, %c0_i32_0 : i32
    scf.if %2 {
      %cst_10 = arith.constant 0.000000e+00 : f32
      %12 = vector.broadcast %cst_10 : f32 to vector<16x128xf32>
      %c0_11 = arith.constant 0 : index
      %c0_12 = arith.constant 0 : index
      %13 = vector.load %arg7[%c0_11, %c0_12] : memref<16x128xf32, #tpu.memory_space<vmem>>, vector<16x128xf32>
      tpu.vector_store %arg7[%c0_11, %c0_12], %12 {strides = array<i32>} : memref<16x128xf32, #tpu.memory_space<vmem>>, vector<16x128xf32>,
    } else {
    }
    %c0 = arith.constant 0 : index
    %c0_1 = arith.constant 0 : index
    %3 = vector.load %arg7[%c0, %c0_1] : memref<16x128xf32, #tpu.memory_space<vmem>>, vector<16x128xf32>
    %c0_2 = arith.constant 0 : index
    %c0_3 = arith.constant 0 : index
    %4 = vector.load %arg3[%c0_2, %c0_3] : memref<16x32xf32, #tpu.memory_space<vmem>>, vector<16x32xf32>
    %c0_4 = arith.constant 0 : index
    %c0_5 = arith.constant 0 : index
    %5 = vector.load %arg4[%c0_4, %c0_5] : memref<32x128xf32, #tpu.memory_space<vmem>>, vector<32x128xf32>
    %cst = arith.constant dense<0.000000e+00> : vector<16x128xf32>
    %6 = tpu.matmul %4, %5, %cst {dimension_numbers = #tpu.dot_dimension_numbers<[1], [0], [0], [1], [0, 0, 1, 1], [], []>} : vector<16x32xf32>, vector<32x128xf32>, vector<16x128xf32> -> vector<16x128xf32>
    %7 = arith.addf %3, %6 : vector<16x128xf32>
    %c0_6 = arith.constant 0 : index
    %c0_7 = arith.constant 0 : index
    %8 = vector.load %arg7[%c0_6, %c0_7] : memref<16x128xf32, #tpu.memory_space<vmem>>, vector<16x128xf32>
    tpu.vector_store %arg7[%c0_6, %c0_7], %7 {strides = array<i32>} : memref<16x128xf32, #tpu.memory_space<vmem>>, vector<16x128xf32>,
    %c0_i32_8 = arith.constant 0 : i32
    %9 = arith.cmpi eq, %arg2, %c0_i32_8 : i32
    %10 = arith.extui %9 : i1 to i32
    %c0_i32_9 = arith.constant 0 : i32
    %11 = arith.cmpi ne, %10, %c0_i32_9 : i32
    scf.if %11 {
      %c0_10 = arith.constant 0 : index
      %c0_11 = arith.constant 0 : index
      %12 = vector.load %arg7[%c0_10, %c0_11] : memref<16x128xf32, #tpu.memory_space<vmem>>, vector<16x128xf32>
      %c0_12 = arith.constant 0 : index
      %c0_13 = arith.constant 0 : index
      %13 = vector.load %arg5[%c0_12, %c0_13] : memref<1x128xf32, #tpu.memory_space<vmem>>, vector<1x128xf32>
      %14 = vector.broadcast %13 : vector<1x128xf32> to vector<16x128xf32>
      %15 = arith.addf %12, %14 : vector<16x128xf32>
      %cst_14 = arith.constant 0.636619746 : f32
      %16 = math.sqrt %cst_14 : f32
      %cst_15 = arith.constant 5.000000e-01 : f32
      %17 = vector.broadcast %cst_15 : f32 to vector<16x128xf32>
      %18 = arith.mulf %17, %15 : vector<16x128xf32>
      %cst_16 = arith.constant 4.471500e-02 : f32
      %19 = vector.broadcast %cst_16 : f32 to vector<16x128xf32>
      %20 = arith.mulf %19, %15 : vector<16x128xf32>
      %21 = arith.mulf %20, %15 : vector<16x128xf32>
      %22 = arith.mulf %21, %15 : vector<16x128xf32>
      %23 = arith.addf %15, %22 : vector<16x128xf32>
      %24 = vector.broadcast %16 : f32 to vector<16x128xf32>
      %25 = arith.mulf %24, %23 : vector<16x128xf32>
      %26 = math.tanh %25 : vector<16x128xf32>
      %cst_17 = arith.constant 1.000000e+00 : f32
      %27 = vector.broadcast %cst_17 : f32 to vector<16x128xf32>
      %28 = arith.addf %27, %26 : vector<16x128xf32>
      %29 = arith.mulf %18, %28 : vector<16x128xf32>
      %c0_18 = arith.constant 0 : index
      %c0_19 = arith.constant 0 : index
      %30 = vector.load %arg6[%c0_18, %c0_19] : memref<16x128xf32, #tpu.memory_space<vmem>>, vector<16x128xf32>
      tpu.vector_store %arg6[%c0_18, %c0_19], %29 {strides = array<i32>} : memref<16x128xf32, #tpu.memory_space<vmem>>, vector<16x128xf32>,
    } else {
    }
    return
  }
  func.func @transform_0(%arg0: i32, %arg1: i32, %arg2: i32) -> (i32, i32) {
    %c0_i32 = arith.constant 0 : i32
    return %arg0, %arg2 : i32, i32
  }
  func.func @transform_1(%arg0: i32, %arg1: i32, %arg2: i32) -> (i32, i32) {
    %c0_i32 = arith.constant 0 : i32
    return %arg2, %arg1 : i32, i32
  }
  func.func @transform_2(%arg0: i32, %arg1: i32, %arg2: i32) -> (i32, i32) {
    %c0_i32 = arith.constant 0 : i32
    %c0_i32_0 = arith.constant 0 : i32
    return %c0_i32, %arg1 : i32, i32
  }
  func.func @transform_3(%arg0: i32, %arg1: i32, %arg2: i32) -> (i32, i32) {
    %c0_i32 = arith.constant 0 : i32
    return %arg0, %arg1 : i32, i32
  }
}

</mosaic_0001>

<llo_original>
// kernel: tpu_custom_call.1
$region0: #{tpu_custom_call.1}
  #allocation0 [shape = 'u32[]', space=smem, size = 0x4, offset = 0x4, fixed_abs, tag = 'smem constant byte address 0x4 - core index']
  #allocation1 [shape = 'u32[144,128]{1,0:T(1,128)}', space=vmem, size = 0x12000, scoped, tag = 'internal scratch']
  #allocation2 [shape = 'f32[16,128]{1,0:T(8,128)}', space=vmem, size = 0x2000, scoped, tag = 'scratch operand']
  %s0 = inlined_call_operand.hbm [shape: f32[16,32], index: 0, kind: input, shape index: {}]
  %s1 = inlined_call_operand.hbm [shape: f32[32,128], index: 1, kind: input, shape index: {}]
  %s2 = inlined_call_operand.vmem [shape: f32[1,128], index: 2, kind: input, shape index: {}]
  %s3 = inlined_call_operand.hbm [shape: f32[16,128], index: 3, kind: output, shape index: {}]
  %s4 = sld [smem:[#allocation0]]
  $region38: #{tpu_custom_call.1} parent=0
    _
  %s6 = ssub.s32 1, %s4
  %s7 = scalar_select 0, %s6, %s4
  $region1: #{tpu_custom_call.1} parent=0
    #allocation3 [shape = 'u8[8192]{0}', space=vmem, size = 0x2000, scoped, tag = 'input window, operand 0, single buffered']
    #allocation4 [shape = 's32[1]{0}', space=sflag, size = 0x4, scoped, tag = 'scoped memory for tpu_custom_call.1']
    #allocation5 [shape = 's32[1]{0}', space=sflag, size = 0x4, scoped, tag = 'scoped memory for tpu_custom_call.1']
    #allocation6 [shape = 'u8[16384]{0}', space=vmem, size = 0x4000, scoped, tag = 'input window, operand 1, single buffered']
    #allocation7 [shape = 's32[1]{0}', space=sflag, size = 0x4, scoped, tag = 'scoped memory for tpu_custom_call.1']
    #allocation8 [shape = 'u8[8192]{0}', space=vmem, size = 0x2000, scoped, tag = 'output window, operand 0, single buffered']
    %8 = vsyncpa [#allocation4], 0
    %9 = vsyncpa [#allocation7], 0
    %10 = vsyncpa [#allocation5], 0
    // Predicated region
    $region2: #{tpu_custom_call.1} parent=1 // pred_check
      _
    $region3: #{tpu_custom_call.1} parent=1 // pred_check_branch
      %12 = sbr.rel (0) target = $region5
    $region4: #{tpu_custom_call.1} parent=1 // pred_region
      %s14 = ssub.s32 256, 256
      %15 = vsyncadd [#allocation4], %s14
      %s16 = sshll.u32 [#allocation3], 4
      %s17 = int_to_ptr.vmem [resolvable:$true] %s16
      %22 = dma.hbm_to_vmem [thread:$0]  %s0, 256, %s17, [#allocation4], 128, 128, 8
    $region5: #{tpu_custom_call.1} parent=1 // pred_fallthru
      _
    // Predicated region
    $region6: #{tpu_custom_call.1} parent=1 // pred_check
      _
    $region7: #{tpu_custom_call.1} parent=1 // pred_check_branch
      %24 = sbr.rel (0) target = $region9
    $region8: #{tpu_custom_call.1} parent=1 // pred_region
      %s26 = ssub.s32 512, 512
      %27 = vsyncadd [#allocation7], %s26
      %s28 = sshll.u32 [#allocation6], 4
      %s29 = int_to_ptr.vmem [resolvable:$true] %s28
      %34 = dma.hbm_to_vmem [thread:$0]  %s1, 512, %s29, [#allocation7], 128, 128, 8
    $region9: #{tpu_custom_call.1} parent=1 // pred_fallthru
      _
    // Predicated region
    $region10: #{tpu_custom_call.1} parent=1 // pred_check
      _
    $region11: #{tpu_custom_call.1} parent=1 // pred_check_branch
      %36 = sbr.rel (0) target = $region13
    $region12: #{tpu_custom_call.1} parent=1 // pred_region
      _
    $region13: #{tpu_custom_call.1} parent=1 // pred_fallthru
      _
    // Predicated region
    $region14: #{tpu_custom_call.1} parent=1 // pred_check
      _
    $region15: #{tpu_custom_call.1} parent=1 // pred_check_branch
      %38 = sbr.rel (0) target = $region17
    $region16: #{tpu_custom_call.1} parent=1 // pred_region
      %39 = dma.done [#allocation4], 256
    $region17: #{tpu_custom_call.1} parent=1 // pred_fallthru
      _
    // Predicated region
    $region18: #{tpu_custom_call.1} parent=1 // pred_check
      _
    $region19: #{tpu_custom_call.1} parent=1 // pred_check_branch
      %41 = sbr.rel (0) target = $region21
    $region20: #{tpu_custom_call.1} parent=1 // pred_region
      %42 = dma.done [#allocation7], 512
    $region21: #{tpu_custom_call.1} parent=1 // pred_fallthru
      _
    %p43 = scmp.eq.s32.totalorder 0, 0
    // Predicated region
    $region22: #{tpu_custom_call.1} parent=1 // pred_check
      %p44 = pneg %p43
    $region23: #{tpu_custom_call.1} parent=1 // pred_check_branch
      %46 = sbr.rel (%p44) target = $region25
    $region24: #{tpu_custom_call.1} parent=1 // pred_region
      %47 = vst [vmem:[#allocation2] sm:$0xff] 0.0
      %48 = vst [vmem:[#allocation2 + $0x8] sm:$0xff] 0.0
    $region25: #{tpu_custom_call.1} parent=1 // pred_fallthru
      _
    %v49 = vld [vmem:[#allocation2] sm:$0xff]
    %v50 = vld [vmem:[#allocation2 + $0x8] sm:$0xff]
    %v51 = vld [vmem:[#allocation3] sm:$0xff]
    %v52 = vld [vmem:[#allocation3 + $0x8] sm:$0xff]
    %v53 = vld [vmem:[#allocation6] sm:$0xff]
    %v54 = vld [vmem:[#allocation6 + $0x8] sm:$0xff]
    %v55 = vld [vmem:[#allocation6 + $0x10] sm:$0xff]
    %v56 = vld [vmem:[#allocation6 + $0x18] sm:$0xff]
    %vm57 = vcmask 261120
    %v59 = vsel %vm57, %v51, 0
    %v62 = vsel %vm57, %v52, 0
    %64 = vmatprep.subr.mxu0 0.0
    %65 = vmatpush1.msra.mxu0 %v53
    %66 = vmatprep.subr.mxu0 0.0
    %67 = vmatpush1.msra.mxu0 %v54
    %68 = vmatprep.subr.mxu0 0.0
    %69 = vmatpush1.msra.mxu0 %v55
    %70 = vmatprep.subr.mxu0 0.0
    %71 = vmatpush1.msra.mxu0 %v56
    %72 = vmatprep.subr.mxu0 0.0
    %73 = vmatpush1.msra.mxu0 0.0
    %74 = vmatprep.subr.mxu0 0.0
    %75 = vmatpush1.msra.mxu0 0.0
    %76 = vmatprep.subr.mxu0 0.0
    %77 = vmatpush1.msra.mxu0 0.0
    %78 = vmatprep.subr.mxu0 0.0
    %79 = vmatpush1.msra.mxu0 0.0
    %80 = vmatprep.subr.mxu0 0.0
    %81 = vmatpush1.msra.mxu0 0.0
    %82 = vmatprep.subr.mxu0 0.0
    %83 = vmatpush1.msra.mxu0 0.0
    %84 = vmatprep.subr.mxu0 0.0
    %85 = vmatpush1.msra.mxu0 0.0
    %86 = vmatprep.subr.mxu0 0.0
    %87 = vmatpush1.msra.mxu0 0.0
    %88 = vmatprep.subr.mxu0 0.0
    %89 = vmatpush1.msra.mxu0 0.0
    %90 = vmatprep.subr.mxu0 0.0
    %91 = vmatpush1.msra.mxu0 0.0
    %92 = vmatprep.subr.mxu0 0.0
    %93 = vmatpush1.msra.mxu0 0.0
    %94 = vmatprep.subr.mxu0 0.0
    %95 = vmatpush1.msra.mxu0 0.0
    %96 = vmatprep.subr.mxu0 0.0
    %97 = vmatpush1.msra.mxu0 0.0
    %98 = vmatprep.subr.mxu0 0.0
    %99 = vmatpush1.msra.mxu0 0.0
    %100 = vmatprep.subr.mxu0 0.0
    %101 = vmatpush1.msra.mxu0 0.0
    %102 = vmatprep.subr.mxu0 0.0
    %103 = vmatpush1.msra.mxu0 0.0
    %104 = vmatprep.subr.mxu0 0.0
    %105 = vmatpush1.msra.mxu0 0.0
    %106 = vmatprep.subr.mxu0 0.0
    %107 = vmatpush1.msra.mxu0 0.0
    %108 = vmatprep.subr.mxu0 0.0
    %109 = vmatpush1.msra.mxu0 0.0
    %110 = vmatprep.subr.mxu0 0.0
    %111 = vmatpush1.msra.mxu0 0.0
    %112 = vmatprep.subr.mxu0 0.0
    %113 = vmatpush1.msra.mxu0 0.0
    %114 = vmatprep.subr.mxu0 0.0
    %115 = vmatpush1.msra.mxu0 0.0
    %116 = vmatprep.subr.mxu0 0.0
    %117 = vmatpush1.msra.mxu0 0.0
    %118 = vmatprep.subr.mxu0 0.0
    %119 = vmatpush1.msra.mxu0 0.0
    %120 = vmatprep.subr.mxu0 0.0
    %121 = vmatpush1.msra.mxu0 0.0
    %122 = vmatprep.subr.mxu0 0.0
    %123 = vmatpush1.msra.mxu0 0.0
    %124 = vmatprep.subr.mxu0 0.0
    %125 = vmatpush1.msra.mxu0 0.0
    %126 = vmatprep.subr.mxu0 0.0
    %127 = vmatpush1.msra.mxu0 0.0
    %128 = vmatprep.mubr.f32.mxu0 0.0
    %129 = vmatmul.mubr.f32.gmra.mrb[0].mxu0 %v59
    %v130 = vpop.f32.mrb[0].mxu0
    %v131 = vadd.f32 0.0, %v130
    %v132 = vpop.f32.mrb[0].mxu0
    %133 = vmatprep.mubr.f32.mxu0 0.0
    %134 = vmatmul.mubr.f32.gmra.mrb[0].mxu0 %v62
    %v135 = vpop.f32.mrb[0].mxu0
    %v136 = vadd.f32 0.0, %v135
    %v137 = vpop.f32.mrb[0].mxu0
    %138 = vdwg.mxu0
    %v139 = vadd.f32 %v49, %v131
    %v140 = vadd.f32 %v50, %v136
    %141 = vst [vmem:[#allocation2] sm:$0xff] %v139
    %142 = vst [vmem:[#allocation2 + $0x8] sm:$0xff] %v140
    // Predicated region
    $region26: #{tpu_custom_call.1} parent=1 // pred_check
      %p143 = pneg %p43
    $region27: #{tpu_custom_call.1} parent=1 // pred_check_branch
      %145 = sbr.rel (%p143) target = $region29
    $region28: #{tpu_custom_call.1} parent=1 // pred_region
      %v146 = vld [vmem:[#allocation2] sm:$0xff]
      %v147 = vld [vmem:[#allocation2 + $0x8] sm:$0xff]
      %v148 = vld [vmem:[%s2] sm:$0x1]
      %v150 = vlaneseq
      %v151 = vshrl.u32 %v150, 7
      %v152 = vsub.s32 0, %v151
      %v153 = vrot.slane %v148, %v152
      %v155 = vadd.f32 %v146, %v153
      %v156 = vadd.f32 %v147, %v153
      %v157 = vmul.f32 %v155, 0.5
      %v158 = vmul.f32 %v156, 0.5
      %v159 = vmul.f32 %v155, 0.044715
      %v160 = vmul.f32 %v156, 0.044715
      %v161 = vmul.f32 %v159, %v155
      %v162 = vmul.f32 %v160, %v156
      %v163 = vmul.f32 %v161, %v155
      %v164 = vmul.f32 %v162, %v156
      %v165 = vadd.f32 %v155, %v163
      %v166 = vadd.f32 %v156, %v164
      %v167 = vmul.f32 %v165, 0.7978845
      %v168 = vmul.f32 %v166, 0.7978845
      %v169 = vtanh.pop %v167
      %v170 = vtanh.pop %v168
      %v171 = vadd.f32 %v169, 1.0
      %v172 = vadd.f32 %v170, 1.0
      %v173 = vmul.f32 %v157, %v171
      %v174 = vmul.f32 %v158, %v172
      %175 = vst [vmem:[#allocation8] sm:$0xff] %v173
      %176 = vst [vmem:[#allocation8 + $0x8] sm:$0xff] %v174
    $region29: #{tpu_custom_call.1} parent=1 // pred_fallthru
      _
    // Predicated region
    $region30: #{tpu_custom_call.1} parent=1 // pred_check
      _
    $region31: #{tpu_custom_call.1} parent=1 // pred_check_branch
      %178 = sbr.rel (0) target = $region33
    $region32: #{tpu_custom_call.1} parent=1 // pred_region
      %s180 = ssub.s32 256, 256
      %181 = vsyncadd [#allocation5], %s180
      %s182 = sshll.u32 [#allocation8], 4
      %s183 = int_to_ptr.vmem [resolvable:$true] %s182
      %188 = dma.vmem_to_hbm [thread:$0]  %s183, 256, %s3, [#allocation5], 128, 128, 8
    $region33: #{tpu_custom_call.1} parent=1 // pred_fallthru
      _
    // Predicated region
    $region34: #{tpu_custom_call.1} parent=1 // pred_check
      _
    $region35: #{tpu_custom_call.1} parent=1 // pred_check_branch
      %190 = sbr.rel (0) target = $region37
    $region36: #{tpu_custom_call.1} parent=1 // pred_region
      %191 = dma.done [#allocation5], 256
    $region37: #{tpu_custom_call.1} parent=1 // pred_fallthru
      _
    %192 = vsyncpa [#allocation4], 1
    %193 = vsyncpa [#allocation7], 1
    %194 = vsyncpa [#allocation5], 1

</llo_original>
